<compile_context>
chip_gen: v7x
topology: tpu7x:2x2x1
jax: 0.10.0
libtpu: 0.0.40
codegen_flags: <defaults>
</compile_context>

<pallas_src>
import functools

import jax
import jax.numpy as jnp
from jax import lax
from jax.experimental import pallas as pl
from jax.experimental.pallas import tpu as pltpu

DEFAULT_ALIF_TAU_ADP = 20.0
DEFAULT_ALIF_TAU_M = 20.0
DEFAULT_ALIF_BETA = 1.8
DEFAULT_ALIF_THETA = 0.01

LANE = 128
SUBLANE = 8

# Tile budget / scoped-VMEM limit chosen to be safe on every generation:
# 40 MiB scoped limit < v7x's 64 MiB physical VMEM, and explicitly above v5e's
# 16 MiB default scoped limit.  Tiles are sized against a 20 MiB budget so
# there is ample headroom for compiler temporaries / spills.
_VMEM_LIMIT_BYTES = 40 * 1024 * 1024
_VMEM_TILE_BUDGET = 20 * 1024 * 1024


def _round_up(x: int, m: int) -> int:
    return ((x + m - 1) // m) * m


def _cdiv(a: int, b: int) -> int:
    return (a + b - 1) // b


# -------------------- parameter glue (plain JAX) --------------------

def quantize_tensor(x: jnp.ndarray, num_bits: int) -> jnp.ndarray:
    """Affine fake-quantization (quantize + dequantize) to `num_bits`.

    # TODO(synk): `quantize_tensor` is not defined in the provided snippet;
    # this uses the standard min/max affine quant-dequant. bits >= 32 is identity.
    """
    if num_bits >= 32:
        return x
    qmin = 0.0
    qmax = 2.0 ** num_bits - 1.0
    min_val = jnp.min(x)
    max_val = jnp.max(x)
    scale = (max_val - min_val) / (qmax - qmin)
    scale = jnp.where(scale == 0.0, jnp.float32(1.0), scale)
    zero_point = jnp.round(jnp.clip(qmin - min_val / scale, qmin, qmax))
    q_x = jnp.round(jnp.clip(zero_point + x / scale, qmin, qmax))
    return (scale * (q_x - zero_point)).astype(x.dtype)


def _prepare_params(tau_mem, tau_adp, bit_precision, l_pad):
    """Pack [alpha, 1-alpha, rho, 1-rho] into one lane-padded (4, L_pad) block."""
    alpha = quantize_tensor(jnp.exp(-1.0 / jnp.abs(tau_mem)), bit_precision)
    rho = quantize_tensor(jnp.exp(-1.0 / jnp.abs(tau_adp)), bit_precision)
    params = jnp.stack([alpha, 1.0 - alpha, rho, 1.0 - rho], axis=0)
    params = params.astype(jnp.float32)
    return jnp.pad(params, ((0, 0), (0, l_pad - params.shape[1])))


def _prepare_weight(weight, i_pad, l_pad, mm_dtype):
    """Pad (L, I) PyTorch-layout weight and transpose once to (I_pad, L_pad)."""
    l, i = weight.shape
    w = jnp.pad(weight, ((0, l_pad - l), (0, i_pad - i)))
    return jnp.transpose(w).astype(mm_dtype)


def _choose_tile_m(b_rows, i_pad, l_pad, mm_bytes):
    """Batch tile size fitting a conservative VMEM budget (single-step path)."""
    budget = 10 * 1024 * 1024
    w_bytes = 2 * i_pad * l_pad * mm_bytes               # resident W, double-buffered
    per_row = 2 * (i_pad * mm_bytes + 6 * l_pad * 4)     # x + state in/out, double-buffered
    tm = (budget - w_bytes) // max(per_row, 1)
    tm = int(max(SUBLANE, min(tm, 512, b_rows)))
    return (tm // SUBLANE) * SUBLANE


def _seq_vmem_bytes(tc, tb, tn, i_pad, mm_bytes, z_bytes):
    """Per-grid-step VMEM estimate for the fused sequence kernel (double-buffered)."""
    x_blk = 2 * tc * tb * i_pad * mm_bytes
    w_blk = 2 * i_pad * tn * mm_bytes
    p_blk = 2 * 4 * tn * 4
    s0_blk = 2 * 3 * tb * tn * 4
    zs_blk = 2 * tc * tb * tn * z_bytes
    sf_blk = 2 * 3 * tb * tn * 4
    scratch = tc * tb * tn * 4
    return x_blk + w_blk + p_blk + s0_blk + zs_blk + sf_blk + scratch


# -------------------- Pallas kernels --------------------

def _alif_step_kernel(x_ref, w_ref, p_ref, s_ref, o_ref, *, beta, theta):
    """Single ALIF timestep: MXU matmul + VPU state update."""
    in_sum = jnp.dot(x_ref[...], w_ref[...], preferred_element_type=jnp.float32)

    alpha = p_ref[0:1, :]          # (1, L_pad) -> broadcast over batch rows
    one_m_alpha = p_ref[1:2, :]
    rho = p_ref[2:3, :]
    one_m_rho = p_ref[3:4, :]

    z = s_ref[0]
    u = s_ref[1]
    a = s_ref[2]

    a_new = a * rho + z * one_m_rho
    theta_t = theta + a_new * beta
    u_new = u * alpha + in_sum * one_m_alpha
    diff = u_new - theta_t
    spike = diff > 0.0                       # forward of StepDoubleGaussianGrad
    z_new = spike.astype(jnp.float32)
    u_new = jnp.where(spike, diff, u_new)    # == u_new - z_new * theta_t (1 op less)

    o_ref[0] = z_new
    o_ref[1] = u_new
    o_ref[2] = a_new


def _alif_fused_seq_kernel(x_ref, w_ref, p_ref, s0_ref, zseq_ref, s_ref,
                           insum_ref, *, beta, theta, tc, t_total):
    """Fused ALIF sequence kernel.

    Grid = (batch_tiles "parallel", layer_tiles "parallel", time_chunks "arbitrary").
    Each grid step: one MXU matmul over a TC-timestep chunk into a VMEM scratch,
    then the recurrence as an unrolled fori_loop with z/u/a carried in registers.
    `s_ref` (final state) stays VMEM-resident across the whole time axis.
    """
    t_chunk = pl.program_id(2)

    @pl.when(t_chunk == 0)
    def _():
        s_ref[...] = s0_ref[...]           # load initial state into resident block

    tb = zseq_ref.shape[1]
    tn = zseq_ref.shape[2]
    i_pad = x_ref.shape[2]

    # ---- fused stage 1: one MXU matmul for the whole time chunk ----
    # (tc, tb, i_pad) -> (tc*tb, i_pad) is a layout-free collapse (tb % 8 == 0).
    x_flat = x_ref[...].reshape(tc * tb, i_pad)
    insum_ref[...] = jnp.dot(x_flat, w_ref[...],
                             preferred_element_type=jnp.float32)

    # ---- stage 2: VPU recurrence; hoist param broadcasts out of the loop ----
    alpha = jnp.broadcast_to(p_ref[0:1, :], (tb, tn))
    one_m_alpha = jnp.broadcast_to(p_ref[1:2, :], (tb, tn))
    rho = jnp.broadcast_to(p_ref[2:3, :], (tb, tn))
    one_m_rho = jnp.broadcast_to(p_ref[3:4, :], (tb, tn))

    pad_tail = (t_total % tc) != 0           # trace-time: only mask when needed

    def step(i, carry):
        z, u, a = carry
        row = pl.multiple_of(i * tb, tb)
        in_sum = insum_ref[pl.ds(row, tb), :]
        a_new = a * rho + z * one_m_rho
        theta_t = theta + a_new * beta
        u_new = u * alpha + in_sum * one_m_alpha
        diff = u_new - theta_t
        spike = diff > 0.0
        z_new = spike.astype(jnp.float32)
        u_new = jnp.where(spike, diff, u_new)          # == u_new - z_new * theta_t
        zseq_ref[i] = z_new.astype(zseq_ref.dtype)     # bf16 store (0/1 lossless)
        if pad_tail:
            valid = (t_chunk * tc + i) < t_total
            z_new = jnp.where(valid, z_new, z)
            u_new = jnp.where(valid, u_new, u)
            a_new = jnp.where(valid, a_new, a)
        return z_new, u_new, a_new

    z, u, a = lax.fori_loop(0, tc, step, (s_ref[0], s_ref[1], s_ref[2]),
                            unroll=True)
    s_ref[0] = z
    s_ref[1] = u
    s_ref[2] = a


# -------------------- wrappers --------------------

def alif_cell_bp_forward(x, state, weight, tau_mem, tau_adp, *,
                         bit_precision: int = 32,
                         beta: float = DEFAULT_ALIF_BETA,
                         theta: float = DEFAULT_ALIF_THETA,
                         use_bf16_matmul: bool = False):
    """Pallas implementation of ALIFCellBP.forward (single timestep).

    x:      (B, input_size) float32
    state:  (z, u, a), each (B, layer_size) float32
    weight: (layer_size, input_size) float32  (PyTorch nn.Linear layout)
    Returns (z, u, a), each (B, layer_size) float32.
    """
    z, u, a = state
    B, input_size = x.shape
    layer_size = weight.shape[0]

    mm_dtype = jnp.bfloat16 if use_bf16_matmul else jnp.float32
    mm_bytes = 2 if use_bf16_matmul else 4
    i_pad = _round_up(input_size, LANE)
    l_pad = _round_up(layer_size, LANE)

    tm = _choose_tile_m(_round_up(B, SUBLANE), i_pad, l_pad, mm_bytes)
    b_pad = _round_up(B, tm)

    x_p = jnp.pad(x, ((0, b_pad - B), (0, i_pad - input_size))).astype(mm_dtype)
    w_p = _prepare_weight(weight, i_pad, l_pad, mm_dtype)
    p_p = _prepare_params(tau_mem, tau_adp, bit_precision, l_pad)
    s_p = jnp.pad(jnp.stack([z, u, a], axis=0).astype(jnp.float32),
                  ((0, 0), (0, b_pad - B), (0, l_pad - layer_size)))

    kernel = functools.partial(_alif_step_kernel, beta=float(beta), theta=float(theta))

    # TODO(synk): for very large input_size/layer_size add K/N grid axes with an
    # accumulator instead of keeping the full W block VMEM-resident.
    out = pl.pallas_call(
        kernel,
        grid=(b_pad // tm,),
        in_specs=[
            pl.BlockSpec((tm, i_pad), lambda i: (i, 0)),        # x tile
            pl.BlockSpec((i_pad, l_pad), lambda i: (0, 0)),     # W, resident
            pl.BlockSpec((4, l_pad), lambda i: (0, 0)),         # packed params, resident
            pl.BlockSpec((3, tm, l_pad), lambda i: (0, i, 0)),  # packed z/u/a state
        ],
        out_specs=pl.BlockSpec((3, tm, l_pad), lambda i: (0, i, 0)),
        out_shape=jax.ShapeDtypeStruct((3, b_pad, l_pad), jnp.float32),
        input_output_aliases={3: 0},                            # state buffer reuse
        compiler_params=pltpu.CompilerParams(
            dimension_semantics=("parallel",),
            vmem_limit_bytes=_VMEM_LIMIT_BYTES),
    )(x_p, w_p, p_p, s_p)

    out = out[:, :B, :layer_size]
    return out[0], out[1], out[2]


def alif_cell_bp_sequence(x_seq, state, weight, tau_mem, tau_adp, *,
                          bit_precision: int = 32,
                          beta: float = DEFAULT_ALIF_BETA,
                          theta: float = DEFAULT_ALIF_THETA,
                          use_bf16_matmul: bool = False,
                          z_seq_dtype=jnp.bfloat16,
                          max_time_chunk: int = 32):
    """Fused ALIFCellBP over a sequence.

    x_seq: (T, B, input_size).  One pallas_call: per (batch tile, layer tile,
    time chunk) grid step, the chunk matmul runs on the MXU into a VMEM scratch
    and the z/u/a recurrence runs on the VPU with the state resident in VMEM
    across the whole "arbitrary" time axis.  Spikes are written as bf16 (0/1 is
    exactly representable).  Returns (z_seq (T,B,L) in `z_seq_dtype`,
    (z, u, a) final state in float32).
    """
    z, u, a = state
    T, B, input_size = x_seq.shape
    layer_size = weight.shape[0]

    mm_dtype = jnp.bfloat16 if use_bf16_matmul else jnp.float32
    mm_bytes = 2 if use_bf16_matmul else 4
    z_bytes = jnp.dtype(z_seq_dtype).itemsize
    i_pad = _round_up(input_size, LANE)
    l_pad = _round_up(layer_size, LANE)

    # --- batch tiling (try to expose >= 2 "parallel" tiles for v7x megacore) ---
    b8 = _round_up(B, SUBLANE)
    tb = min(b8, 256)
    if b8 // tb < 2 and b8 >= 2 * SUBLANE:
        tb = _round_up(b8 // 2, SUBLANE)
    b_pad = _round_up(b8, tb)

    # --- layer (N) tiling: bounds W's resident block; gives v7x a 2nd parallel
    #     tile when the batch only yields one. ---
    tn = l_pad
    if (b_pad // tb) < 2 and l_pad % (2 * LANE) == 0:
        tn = l_pad // 2
    while (_seq_vmem_bytes(1, tb, tn, i_pad, mm_bytes, z_bytes) > _VMEM_TILE_BUDGET
           and tn % (2 * LANE) == 0):
        tn //= 2
    # TODO(synk): for very large input_size also tile the K (i_pad) axis.

    # --- time chunking: largest chunk (<= max_time_chunk) fitting the budget ---
    tc = 1
    for cand in (32, 16, 8, 4, 2, 1):
        cand = max(1, min(cand, max_time_chunk, T))
        c = _cdiv(T, _cdiv(T, cand))
        if _seq_vmem_bytes(c, tb, tn, i_pad, mm_bytes, z_bytes) <= _VMEM_TILE_BUDGET:
            tc = c
            break
    t_chunks = _cdiv(T, tc)
    t_pad = t_chunks * tc

    w_p = _prepare_weight(weight, i_pad, l_pad, mm_dtype)
    p_p = _prepare_params(tau_mem, tau_adp, bit_precision, l_pad)
    x_p = jnp.pad(x_seq, ((0, t_pad - T), (0, b_pad - B),
                          (0, i_pad - input_size))).astype(mm_dtype)
    s0 = jnp.pad(jnp.stack([z, u, a], axis=0).astype(jnp.float32),
                 ((0, 0), (0, b_pad - B), (0, l_pad - layer_size)))

    kernel = functools.partial(_alif_fused_seq_kernel, beta=float(beta),
                               theta=float(theta), tc=tc, t_total=T)

    z_seq, s_final = pl.pallas_call(
        kernel,
        grid=(b_pad // tb, l_pad // tn, t_chunks),
        in_specs=[
            pl.BlockSpec((tc, tb, i_pad), lambda b, n, t: (t, b, 0)),  # x chunk
            pl.BlockSpec((i_pad, tn), lambda b, n, t: (0, n)),         # W (resident over t)
            pl.BlockSpec((4, tn), lambda b, n, t: (0, n)),             # packed params
            pl.BlockSpec((3, tb, tn), lambda b, n, t: (0, b, n)),      # initial state
        ],
        out_specs=(
            pl.BlockSpec((tc, tb, tn), lambda b, n, t: (t, b, n)),     # spike sequence
            pl.BlockSpec((3, tb, tn), lambda b, n, t: (0, b, n)),      # final state (resident)
        ),
        out_shape=(
            jax.ShapeDtypeStruct((t_pad, b_pad, l_pad), z_seq_dtype),
            jax.ShapeDtypeStruct((3, b_pad, l_pad), jnp.float32),
        ),
        scratch_shapes=[pltpu.VMEM((tc * tb, tn), jnp.float32)],       # fused in_sum
        input_output_aliases={3: 1},                                   # s0 -> s_final
        compiler_params=pltpu.CompilerParams(
            dimension_semantics=("parallel", "parallel", "arbitrary"),
            vmem_limit_bytes=_VMEM_LIMIT_BYTES),
    )(x_p, w_p, p_p, s0)

    z_seq = z_seq[:T, :B, :layer_size]
    s_final = s_final[:, :B, :layer_size]
    return z_seq, (s_final[0], s_final[1], s_final[2])


# -------------------- deterministic parameter init --------------------

def init_alif_params(key, input_size, layer_size,
                     adaptive_tau_mem_mean=20.0, adaptive_tau_mem_std=5.0,
                     adaptive_tau_adp_mean=20.0, adaptive_tau_adp_std=5.0):
    k_w, k_tm, k_ta = jax.random.split(key, 3)
    bound = jnp.sqrt(6.0 / (input_size + layer_size))   # xavier_uniform_
    weight = jax.random.uniform(k_w, (layer_size, input_size),
                                minval=-bound, maxval=bound, dtype=jnp.float32)
    tau_mem = adaptive_tau_mem_mean + adaptive_tau_mem_std * \
        jax.random.normal(k_tm, (layer_size,), dtype=jnp.float32)
    tau_adp = adaptive_tau_adp_mean + adaptive_tau_adp_std * \
        jax.random.normal(k_ta, (layer_size,), dtype=jnp.float32)
    return weight, tau_mem, tau_adp


# -------------------- pure-JAX reference --------------------

def _reference_step(x, state, weight, tau_mem, tau_adp, bit_precision,
                    beta=DEFAULT_ALIF_BETA, theta=DEFAULT_ALIF_THETA):
    z, u, a = state
    in_sum = x @ weight.T
    alpha = quantize_tensor(jnp.exp(-1.0 / jnp.abs(tau_mem)), bit_precision)
    rho = quantize_tensor(jnp.exp(-1.0 / jnp.abs(tau_adp)), bit_precision)
    a = a * rho + z * (1.0 - rho)
    theta_t = theta + a * beta
    u = u * alpha + in_sum * (1.0 - alpha)
    z = (u - theta_t > 0.0).astype(jnp.float32)
    u = u - z * theta_t
    return z, u, a


def _reference_sequence(x_seq, state, weight, tau_mem, tau_adp, bit_precision):
    st = state
    zs = []
    for t in range(x_seq.shape[0]):
        st = _reference_step(x_seq[t], st, weight, tau_mem, tau_adp, bit_precision)
        zs.append(st[0])
    return jnp.stack(zs, axis=0), st


if __name__ == "__main__":
    import numpy as np

    key = jax.random.PRNGKey(0)

    # ---------- test 1: small, divisible shapes ----------
    B, INPUT_SIZE, LAYER_SIZE, T, BIT_PRECISION = 8, 32, 32, 8, 8
    k_p, k_x, k_xs, k_z, k_u, k_a, key = jax.random.split(key, 7)
    weight, tau_mem, tau_adp = init_alif_params(k_p, INPUT_SIZE, LAYER_SIZE)
    x = jax.random.normal(k_x, (B, INPUT_SIZE), dtype=jnp.float32)
    x_seq = jax.random.normal(k_xs, (T, B, INPUT_SIZE), dtype=jnp.float32)
    z0 = (jax.random.uniform(k_z, (B, LAYER_SIZE)) > 0.5).astype(jnp.float32)
    u0 = 0.1 * jax.random.normal(k_u, (B, LAYER_SIZE), dtype=jnp.float32)
    a0 = 0.1 * jax.random.normal(k_a, (B, LAYER_SIZE), dtype=jnp.float32)
    state = (z0, u0, a0)

    # single-step forward (module semantics), f32 MXU path
    z, u, a = alif_cell_bp_forward(x, state, weight, tau_mem, tau_adp,
                                   bit_precision=BIT_PRECISION)
    jax.block_until_ready((z, u, a))
    z_r, u_r, a_r = _reference_step(x, state, weight, tau_mem, tau_adp, BIT_PRECISION)
    np.testing.assert_allclose(np.asarray(z), np.asarray(z_r), atol=1e-4)
    np.testing.assert_allclose(np.asarray(u), np.asarray(u_r), atol=1e-4)
    np.testing.assert_allclose(np.asarray(a), np.asarray(a_r), atol=1e-4)

    # fused sequence kernel
    z_seq, (zf, uf, af) = alif_cell_bp_sequence(x_seq, state, weight, tau_mem,
                                                tau_adp, bit_precision=BIT_PRECISION)
    jax.block_until_ready((z_seq, zf, uf, af))
    z_seq_ref, st_ref = _reference_sequence(x_seq, state, weight, tau_mem,
                                            tau_adp, BIT_PRECISION)
    np.testing.assert_allclose(np.asarray(z_seq).astype(np.float32),
                               np.asarray(z_seq_ref), atol=1e-4)
    np.testing.assert_allclose(np.asarray(zf), np.asarray(st_ref[0]), atol=1e-4)
    np.testing.assert_allclose(np.asarray(uf), np.asarray(st_ref[1]), atol=1e-4)
    np.testing.assert_allclose(np.asarray(af), np.asarray(st_ref[2]), atol=1e-4)

    # ---------- test 2: ragged shapes (time-tail mask, batch tiles, padding) ----------
    B2, IN2, L2, T2 = 24, 20, 40, 11
    k_p2, k_xs2, k_z2, k_u2, k_a2, key = jax.random.split(key, 6)
    w2, tm2, ta2 = init_alif_params(k_p2, IN2, L2)
    x_seq2 = jax.random.normal(k_xs2, (T2, B2, IN2), dtype=jnp.float32)
    st2 = ((jax.random.uniform(k_z2, (B2, L2)) > 0.5).astype(jnp.float32),
           0.1 * jax.random.normal(k_u2, (B2, L2), dtype=jnp.float32),
           0.1 * jax.random.normal(k_a2, (B2, L2), dtype=jnp.float32))
    z_seq2, (zf2, uf2, af2) = alif_cell_bp_sequence(
        x_seq2, st2, w2, tm2, ta2, bit_precision=BIT_PRECISION, max_time_chunk=8)
    jax.block_until_ready((z_seq2, zf2, uf2, af2))
    z_seq2_ref, st2_ref = _reference_sequence(x_seq2, st2, w2, tm2, ta2, BIT_PRECISION)
    np.testing.assert_allclose(np.asarray(z_seq2).astype(np.float32),
                               np.asarray(z_seq2_ref), atol=1e-4)
    np.testing.assert_allclose(np.asarray(zf2), np.asarray(st2_ref[0]), atol=1e-4)
    np.testing.assert_allclose(np.asarray(uf2), np.asarray(st2_ref[1]), atol=1e-4)
    np.testing.assert_allclose(np.asarray(af2), np.asarray(st2_ref[2]), atol=1e-4)

    # ---------- bf16-MXU variant (v6e/v7x fast path): compile/run check only;
    # the hard spike threshold means bit-exact agreement with f32 is not guaranteed.
    out_bf16 = alif_cell_bp_forward(x, state, weight, tau_mem, tau_adp,
                                    bit_precision=BIT_PRECISION,
                                    use_bf16_matmul=True)
    jax.block_until_ready(out_bf16)
    out_bf16_seq = alif_cell_bp_sequence(x_seq, state, weight, tau_mem, tau_adp,
                                         bit_precision=BIT_PRECISION,
                                         use_bf16_matmul=True)
    jax.block_until_ready(out_bf16_seq)

    print("KERNEL_OK")
</pallas_src>

<mosaic_0001>
module attributes {stable_mosaic.version = 11 : i64} {
  func.func @_alif_step_kernel(%arg0: i32, %arg1: memref<8x128xf32, #tpu.memory_space<vmem>>, %arg2: memref<128x128xf32, #tpu.memory_space<vmem>>, %arg3: memref<4x128xf32, #tpu.memory_space<vmem>>, %arg4: memref<3x8x128xf32, #tpu.memory_space<vmem>>, %arg5: memref<3x8x128xf32, #tpu.memory_space<vmem>>) attributes {dimension_semantics = [#tpu.dimension_semantics<parallel>], iteration_bounds = array<i64: 1>, scalar_prefetch = 0 : i64, scratch_operands = 0 : i64, tpu.core_type = #tpu.core_type<tc>, window_params = [{transform_indices = @transform_0, window_bounds = array<i64: 8, 128>}, {pipeline_mode = #tpu.pipeline_mode<synchronous>, transform_indices = @transform_1, window_bounds = array<i64: 128, 128>}, {pipeline_mode = #tpu.pipeline_mode<synchronous>, transform_indices = @transform_2, window_bounds = array<i64: 4, 128>}, {transform_indices = @transform_3, window_bounds = array<i64: 3, 8, 128>}, {transform_indices = @transform_4, window_bounds = array<i64: 3, 8, 128>}]} {
    %c0 = arith.constant 0 : index
    %c0_0 = arith.constant 0 : index
    %0 = vector.load %arg1[%c0, %c0_0] : memref<8x128xf32, #tpu.memory_space<vmem>>, vector<8x128xf32>
    %c0_1 = arith.constant 0 : index
    %c0_2 = arith.constant 0 : index
    %1 = vector.load %arg2[%c0_1, %c0_2] : memref<128x128xf32, #tpu.memory_space<vmem>>, vector<128x128xf32>
    %cst = arith.constant dense<0.000000e+00> : vector<8x128xf32>
    %2 = tpu.matmul %0, %1, %cst {dimension_numbers = #tpu.dot_dimension_numbers<[1], [0], [0], [1], [0, 0, 1, 1], [], []>} : vector<8x128xf32>, vector<128x128xf32>, vector<8x128xf32> -> vector<8x128xf32>
    %c0_3 = arith.constant 0 : index
    %c0_4 = arith.constant 0 : index
    %3 = vector.load %arg3[%c0_3, %c0_4] : memref<4x128xf32, #tpu.memory_space<vmem>>, vector<1x128xf32>
    %c1 = arith.constant 1 : index
    %c0_5 = arith.constant 0 : index
    %4 = vector.load %arg3[%c1, %c0_5] : memref<4x128xf32, #tpu.memory_space<vmem>>, vector<1x128xf32>
    %c2 = arith.constant 2 : index
    %c0_6 = arith.constant 0 : index
    %5 = vector.load %arg3[%c2, %c0_6] : memref<4x128xf32, #tpu.memory_space<vmem>>, vector<1x128xf32>
    %c3 = arith.constant 3 : index
    %c0_7 = arith.constant 0 : index
    %6 = vector.load %arg3[%c3, %c0_7] : memref<4x128xf32, #tpu.memory_space<vmem>>, vector<1x128xf32>
    %c0_8 = arith.constant 0 : index
    %c0_9 = arith.constant 0 : index
    %c0_10 = arith.constant 0 : index
    %7 = vector.load %arg4[%c0_8, %c0_9, %c0_10] : memref<3x8x128xf32, #tpu.memory_space<vmem>>, vector<1x8x128xf32>
    %8 = vector.shape_cast %7 : vector<1x8x128xf32> to vector<8x128xf32>
    %c1_11 = arith.constant 1 : index
    %c0_12 = arith.constant 0 : index
    %c0_13 = arith.constant 0 : index
    %9 = vector.load %arg4[%c1_11, %c0_12, %c0_13] : memref<3x8x128xf32, #tpu.memory_space<vmem>>, vector<1x8x128xf32>
    %10 = vector.shape_cast %9 : vector<1x8x128xf32> to vector<8x128xf32>
    %c2_14 = arith.constant 2 : index
    %c0_15 = arith.constant 0 : index
    %c0_16 = arith.constant 0 : index
    %11 = vector.load %arg4[%c2_14, %c0_15, %c0_16] : memref<3x8x128xf32, #tpu.memory_space<vmem>>, vector<1x8x128xf32>
    %12 = vector.shape_cast %11 : vector<1x8x128xf32> to vector<8x128xf32>
    %13 = vector.broadcast %5 : vector<1x128xf32> to vector<8x128xf32>
    %14 = arith.mulf %12, %13 : vector<8x128xf32>
    %15 = vector.broadcast %6 : vector<1x128xf32> to vector<8x128xf32>
    %16 = arith.mulf %8, %15 : vector<8x128xf32>
    %17 = arith.addf %14, %16 : vector<8x128xf32>
    %cst_17 = arith.constant 1.800000e+00 : f32
    %18 = vector.broadcast %cst_17 : f32 to vector<8x128xf32>
    %19 = arith.mulf %17, %18 : vector<8x128xf32>
    %cst_18 = arith.constant 0.00999999977 : f32
    %20 = vector.broadcast %cst_18 : f32 to vector<8x128xf32>
    %21 = arith.addf %20, %19 : vector<8x128xf32>
    %22 = vector.broadcast %3 : vector<1x128xf32> to vector<8x128xf32>
    %23 = arith.mulf %10, %22 : vector<8x128xf32>
    %24 = vector.broadcast %4 : vector<1x128xf32> to vector<8x128xf32>
    %25 = arith.mulf %2, %24 : vector<8x128xf32>
    %26 = arith.addf %23, %25 : vector<8x128xf32>
    %27 = arith.subf %26, %21 : vector<8x128xf32>
    %cst_19 = arith.constant 0.000000e+00 : f32
    %28 = vector.broadcast %cst_19 : f32 to vector<8x128xf32>
    %29 = arith.cmpf ogt, %27, %28 : vector<8x128xf32>
    %30 = arith.extui %29 : vector<8x128xi1> to vector<8x128xi32>
    %31 = arith.sitofp %30 : vector<8x128xi32> to vector<8x128xf32>
    %32 = arith.select %29, %27, %26 : vector<8x128xi1>, vector<8x128xf32>
    %c0_20 = arith.constant 0 : index
    %c0_21 = arith.constant 0 : index
    %c0_22 = arith.constant 0 : index
    %33 = vector.load %arg5[%c0_20, %c0_21, %c0_22] : memref<3x8x128xf32, #tpu.memory_space<vmem>>, vector<1x8x128xf32>
    %34 = vector.shape_cast %33 : vector<1x8x128xf32> to vector<8x128xf32>
    %35 = vector.shape_cast %31 : vector<8x128xf32> to vector<1x8x128xf32>
    tpu.vector_store %arg5[%c0_20, %c0_21, %c0_22], %35 {strides = array<i32>} : memref<3x8x128xf32, #tpu.memory_space<vmem>>, vector<1x8x128xf32>,
    %c1_23 = arith.constant 1 : index
    %c0_24 = arith.constant 0 : index
    %c0_25 = arith.constant 0 : index
    %36 = vector.load %arg5[%c1_23, %c0_24, %c0_25] : memref<3x8x128xf32, #tpu.memory_space<vmem>>, vector<1x8x128xf32>
    %37 = vector.shape_cast %36 : vector<1x8x128xf32> to vector<8x128xf32>
    %38 = vector.shape_cast %32 : vector<8x128xf32> to vector<1x8x128xf32>
    tpu.vector_store %arg5[%c1_23, %c0_24, %c0_25], %38 {strides = array<i32>} : memref<3x8x128xf32, #tpu.memory_space<vmem>>, vector<1x8x128xf32>,
    %c2_26 = arith.constant 2 : index
    %c0_27 = arith.constant 0 : index
    %c0_28 = arith.constant 0 : index
    %39 = vector.load %arg5[%c2_26, %c0_27, %c0_28] : memref<3x8x128xf32, #tpu.memory_space<vmem>>, vector<1x8x128xf32>
    %40 = vector.shape_cast %39 : vector<1x8x128xf32> to vector<8x128xf32>
    %41 = vector.shape_cast %17 : vector<8x128xf32> to vector<1x8x128xf32>
    tpu.vector_store %arg5[%c2_26, %c0_27, %c0_28], %41 {strides = array<i32>} : memref<3x8x128xf32, #tpu.memory_space<vmem>>, vector<1x8x128xf32>,
    return
  }
  func.func @transform_0(%arg0: i32) -> (i32, i32) {
    %c0_i32 = arith.constant 0 : i32
    %c0_i32_0 = arith.constant 0 : i32
    return %arg0, %c0_i32 : i32, i32
  }
  func.func @transform_1(%arg0: i32) -> (i32, i32) {
    %c0_i32 = arith.constant 0 : i32
    %c0_i32_0 = arith.constant 0 : i32
    %c0_i32_1 = arith.constant 0 : i32
    return %c0_i32, %c0_i32_0 : i32, i32
  }
  func.func @transform_2(%arg0: i32) -> (i32, i32) {
    %c0_i32 = arith.constant 0 : i32
    %c0_i32_0 = arith.constant 0 : i32
    %c0_i32_1 = arith.constant 0 : i32
    return %c0_i32, %c0_i32_0 : i32, i32
  }
  func.func @transform_3(%arg0: i32) -> (i32, i32, i32) {
    %c0_i32 = arith.constant 0 : i32
    %c0_i32_0 = arith.constant 0 : i32
    %c0_i32_1 = arith.constant 0 : i32
    return %c0_i32, %arg0, %c0_i32_0 : i32, i32, i32
  }
  func.func @transform_4(%arg0: i32) -> (i32, i32, i32) {
    %c0_i32 = arith.constant 0 : i32
    %c0_i32_0 = arith.constant 0 : i32
    %c0_i32_1 = arith.constant 0 : i32
    return %c0_i32, %arg0, %c0_i32_0 : i32, i32, i32
  }
}

</mosaic_0001>

<llo_original>
// kernel: tpu_custom_call.1
$region0: #{tpu_custom_call.1}
  #allocation0 [shape = 'u32[]', space=smem, size = 0x4, offset = 0x4, fixed_abs, tag = 'smem constant byte address 0x4 - core index']
  #allocation1 [shape = 'u32[144,128]{1,0:T(1,128)}', space=vmem, size = 0x12000, scoped, tag = 'internal scratch']
  %s0 = inlined_call_operand.vmem [shape: f32[8,128], index: 0, kind: input, shape index: {}]
  %s1 = inlined_call_operand.hbm [shape: f32[128,128], index: 1, kind: input, shape index: {}]
  %s2 = inlined_call_operand.vmem [shape: f32[4,128], index: 2, kind: input, shape index: {}]
  %s3 = inlined_call_operand.hbm [shape: f32[3,8,128], index: 3, kind: input, shape index: {}, may-alias: {3,4}]
  %s4 = inlined_call_operand.hbm [shape: f32[3,8,128], index: 4, kind: output, shape index: {}, may-alias: {3,4}]
  %s5 = sld [smem:[#allocation0]]
  $region34: #{tpu_custom_call.1} parent=0
    _
  %s7 = ssub.s32 1, %s5
  %s8 = scalar_select 0, %s7, %s5
  $region1: #{tpu_custom_call.1} parent=0
    #allocation2 [shape = 'u8[65536]{0}', space=vmem, size = 0x10000, scoped, tag = 'input window, operand 1, single buffered']
    #allocation3 [shape = 's32[1]{0}', space=sflag, size = 0x4, scoped, tag = 'scoped memory for tpu_custom_call.1']
    #allocation4 [shape = 's32[1]{0}', space=sflag, size = 0x4, scoped, tag = 'scoped memory for tpu_custom_call.1']
    #allocation5 [shape = 'u8[12288]{0}', space=vmem, size = 0x3000, scoped, tag = 'input window, operand 3, single buffered']
    #allocation6 [shape = 's32[1]{0}', space=sflag, size = 0x4, scoped, tag = 'scoped memory for tpu_custom_call.1']
    #allocation7 [shape = 'u8[12288]{0}', space=vmem, size = 0x3000, scoped, tag = 'output window, operand 0, single buffered']
    %9 = vsyncpa [#allocation3], 0
    %10 = vsyncpa [#allocation6], 0
    %11 = vsyncpa [#allocation4], 0
    // Predicated region
    $region2: #{tpu_custom_call.1} parent=1 // pred_check
      _
    $region3: #{tpu_custom_call.1} parent=1 // pred_check_branch
      %13 = sbr.rel (0) target = $region5
    $region4: #{tpu_custom_call.1} parent=1 // pred_region
      _
    $region5: #{tpu_custom_call.1} parent=1 // pred_fallthru
      _
    // Predicated region
    $region6: #{tpu_custom_call.1} parent=1 // pred_check
      _
    $region7: #{tpu_custom_call.1} parent=1 // pred_check_branch
      %15 = sbr.rel (0) target = $region9
    $region8: #{tpu_custom_call.1} parent=1 // pred_region
      %s17 = ssub.s32 2048, 2048
      %18 = vsyncadd [#allocation3], %s17
      %s19 = sshll.u32 [#allocation2], 4
      %s20 = int_to_ptr.vmem [resolvable:$true] %s19
      %25 = dma.hbm_to_vmem [thread:$0]  %s1, 2048, %s20, [#allocation3], 128, 128, 8
    $region9: #{tpu_custom_call.1} parent=1 // pred_fallthru
      _
    // Predicated region
    $region10: #{tpu_custom_call.1} parent=1 // pred_check
      _
    $region11: #{tpu_custom_call.1} parent=1 // pred_check_branch
      %27 = sbr.rel (0) target = $region13
    $region12: #{tpu_custom_call.1} parent=1 // pred_region
      _
    $region13: #{tpu_custom_call.1} parent=1 // pred_fallthru
      _
    // Predicated region
    $region14: #{tpu_custom_call.1} parent=1 // pred_check
      _
    $region15: #{tpu_custom_call.1} parent=1 // pred_check_branch
      %29 = sbr.rel (0) target = $region17
    $region16: #{tpu_custom_call.1} parent=1 // pred_region
      %s31 = ssub.s32 384, 384
      %32 = vsyncadd [#allocation6], %s31
      %s33 = sshll.u32 [#allocation5], 4
      %s34 = int_to_ptr.vmem [resolvable:$true] %s33
      %39 = dma.hbm_to_vmem [thread:$0]  %s3, 384, %s34, [#allocation6], 128, 128, 8
    $region17: #{tpu_custom_call.1} parent=1 // pred_fallthru
      _
    // Predicated region
    $region18: #{tpu_custom_call.1} parent=1 // pred_check
      _
    $region19: #{tpu_custom_call.1} parent=1 // pred_check_branch
      %41 = sbr.rel (0) target = $region21
    $region20: #{tpu_custom_call.1} parent=1 // pred_region
      %42 = dma.done [#allocation3], 2048
    $region21: #{tpu_custom_call.1} parent=1 // pred_fallthru
      _
    // Predicated region
    $region22: #{tpu_custom_call.1} parent=1 // pred_check
      _
    $region23: #{tpu_custom_call.1} parent=1 // pred_check_branch
      %44 = sbr.rel (0) target = $region25
    $region24: #{tpu_custom_call.1} parent=1 // pred_region
      %45 = dma.done [#allocation6], 384
    $region25: #{tpu_custom_call.1} parent=1 // pred_fallthru
      _
    %v46 = vld [vmem:[%s0] sm:$0xff]
    %v47 = vld [vmem:[#allocation2] sm:$0xff]
    %v48 = vld [vmem:[#allocation2 + $0x8] sm:$0xff]
    %v49 = vld [vmem:[#allocation2 + $0x10] sm:$0xff]
    %v50 = vld [vmem:[#allocation2 + $0x18] sm:$0xff]
    %v51 = vld [vmem:[#allocation2 + $0x20] sm:$0xff]
    %v52 = vld [vmem:[#allocation2 + $0x28] sm:$0xff]
    %v53 = vld [vmem:[#allocation2 + $0x30] sm:$0xff]
    %v54 = vld [vmem:[#allocation2 + $0x38] sm:$0xff]
    %v55 = vld [vmem:[#allocation2 + $0x40] sm:$0xff]
    %v56 = vld [vmem:[#allocation2 + $0x48] sm:$0xff]
    %v57 = vld [vmem:[#allocation2 + $0x50] sm:$0xff]
    %v58 = vld [vmem:[#allocation2 + $0x58] sm:$0xff]
    %v59 = vld [vmem:[#allocation2 + $0x60] sm:$0xff]
    %v60 = vld [vmem:[#allocation2 + $0x68] sm:$0xff]
    %v61 = vld [vmem:[#allocation2 + $0x70] sm:$0xff]
    %v62 = vld [vmem:[#allocation2 + $0x78] sm:$0xff]
    %63 = vmatprep.subr.mxu0 0.0
    %64 = vmatpush1.msra.mxu0 %v47
    %65 = vmatprep.subr.mxu0 0.0
    %66 = vmatpush1.msra.mxu0 %v48
    %67 = vmatprep.subr.mxu0 0.0
    %68 = vmatpush1.msra.mxu0 %v49
    %69 = vmatprep.subr.mxu0 0.0
    %70 = vmatpush1.msra.mxu0 %v50
    %71 = vmatprep.subr.mxu0 0.0
    %72 = vmatpush1.msra.mxu0 %v51
    %73 = vmatprep.subr.mxu0 0.0
    %74 = vmatpush1.msra.mxu0 %v52
    %75 = vmatprep.subr.mxu0 0.0
    %76 = vmatpush1.msra.mxu0 %v53
    %77 = vmatprep.subr.mxu0 0.0
    %78 = vmatpush1.msra.mxu0 %v54
    %79 = vmatprep.subr.mxu0 0.0
    %80 = vmatpush1.msra.mxu0 %v55
    %81 = vmatprep.subr.mxu0 0.0
    %82 = vmatpush1.msra.mxu0 %v56
    %83 = vmatprep.subr.mxu0 0.0
    %84 = vmatpush1.msra.mxu0 %v57
    %85 = vmatprep.subr.mxu0 0.0
    %86 = vmatpush1.msra.mxu0 %v58
    %87 = vmatprep.subr.mxu0 0.0
    %88 = vmatpush1.msra.mxu0 %v59
    %89 = vmatprep.subr.mxu0 0.0
    %90 = vmatpush1.msra.mxu0 %v60
    %91 = vmatprep.subr.mxu0 0.0
    %92 = vmatpush1.msra.mxu0 %v61
    %93 = vmatprep.subr.mxu0 0.0
    %94 = vmatpush1.msra.mxu0 %v62
    %95 = vmatprep.subr.mxu0 0.0
    %96 = vmatpush1.msra.mxu0 0.0
    %97 = vmatprep.subr.mxu0 0.0
    %98 = vmatpush1.msra.mxu0 0.0
    %99 = vmatprep.subr.mxu0 0.0
    %100 = vmatpush1.msra.mxu0 0.0
    %101 = vmatprep.subr.mxu0 0.0
    %102 = vmatpush1.msra.mxu0 0.0
    %103 = vmatprep.subr.mxu0 0.0
    %104 = vmatpush1.msra.mxu0 0.0
    %105 = vmatprep.subr.mxu0 0.0
    %106 = vmatpush1.msra.mxu0 0.0
    %107 = vmatprep.subr.mxu0 0.0
    %108 = vmatpush1.msra.mxu0 0.0
    %109 = vmatprep.subr.mxu0 0.0
    %110 = vmatpush1.msra.mxu0 0.0
    %111 = vmatprep.subr.mxu0 0.0
    %112 = vmatpush1.msra.mxu0 0.0
    %113 = vmatprep.subr.mxu0 0.0
    %114 = vmatpush1.msra.mxu0 0.0
    %115 = vmatprep.subr.mxu0 0.0
    %116 = vmatpush1.msra.mxu0 0.0
    %117 = vmatprep.subr.mxu0 0.0
    %118 = vmatpush1.msra.mxu0 0.0
    %119 = vmatprep.subr.mxu0 0.0
    %120 = vmatpush1.msra.mxu0 0.0
    %121 = vmatprep.subr.mxu0 0.0
    %122 = vmatpush1.msra.mxu0 0.0
    %123 = vmatprep.subr.mxu0 0.0
    %124 = vmatpush1.msra.mxu0 0.0
    %125 = vmatprep.subr.mxu0 0.0
    %126 = vmatpush1.msra.mxu0 0.0
    %127 = vmatprep.mubr.f32.mxu0 0.0
    %128 = vmatmul.mubr.f32.gmra.mrb[0].mxu0 %v46
    %v129 = vpop.f32.mrb[0].mxu0
    %v130 = vadd.f32 0.0, %v129
    %v131 = vpop.f32.mrb[0].mxu0
    %132 = vdwg.mxu0
    %v133 = vld [vmem:[%s2] sm:$0x1]
    %v134 = vld [vmem:[%s2 + $0x1] sm:$0x1]
    %v135 = vld [vmem:[%s2 + $0x2] sm:$0x1]
    %v136 = vld [vmem:[%s2 + $0x3] sm:$0x1]
    %v137 = vld [vmem:[#allocation5] sm:$0xff]
    %s138 = scalar_lea.vmem [#allocation5], 8
    %v139 = vld [vmem:[%s138] sm:$0xff]
    %s140 = scalar_lea.vmem [#allocation5], 16
    %v141 = vld [vmem:[%s140] sm:$0xff]
    %v142 = vlaneseq
    %v143 = vshrl.u32 %v142, 7
    %v144 = vsub.s32 0, %v143
    %v145 = vrot.slane %v135, %v144
    %v146 = vmul.f32 %v141, %v145
    %v147 = vlaneseq
    %v148 = vshrl.u32 %v147, 7
    %v149 = vsub.s32 0, %v148
    %v150 = vrot.slane %v136, %v149
    %v151 = vmul.f32 %v137, %v150
    %v152 = vadd.f32 %v146, %v151
    %v153 = vmul.f32 %v152, 1.8
    %v154 = vadd.f32 %v153, 0.01
    %v155 = vlaneseq
    %v156 = vshrl.u32 %v155, 7
    %v157 = vsub.s32 0, %v156
    %v158 = vrot.slane %v133, %v157
    %v159 = vmul.f32 %v139, %v158
    %v160 = vlaneseq
    %v161 = vshrl.u32 %v160, 7
    %v162 = vsub.s32 0, %v161
    %v163 = vrot.slane %v134, %v162
    %v164 = vmul.f32 %v130, %v163
    %v165 = vadd.f32 %v159, %v164
    %v166 = vsub.f32 %v165, %v154
    %vm167 = vcmp.gt.f32.partialorder %v166, 0.0
    %v168 = vsel %vm167, 1, 0
    %v169 = vcvt.s32.f32 %v168
    %v170 = vsel %vm167, %v166, %v165
    %171 = vst [vmem:[#allocation7] sm:$0xff] %v169
    %s172 = scalar_lea.vmem [#allocation7], 8
    %173 = vst [vmem:[%s172] sm:$0xff] %v170
    %s174 = scalar_lea.vmem [#allocation7], 16
    %175 = vst [vmem:[%s174] sm:$0xff] %v152
    // Predicated region
    $region26: #{tpu_custom_call.1} parent=1 // pred_check
      _
    $region27: #{tpu_custom_call.1} parent=1 // pred_check_branch
      %177 = sbr.rel (0) target = $region29
    $region28: #{tpu_custom_call.1} parent=1 // pred_region
      %s179 = ssub.s32 384, 384
      %180 = vsyncadd [#allocation4], %s179
      %s181 = sshll.u32 [#allocation7], 4
      %s182 = int_to_ptr.vmem [resolvable:$true] %s181
      %187 = dma.vmem_to_hbm [thread:$0]  %s182, 384, %s4, [#allocation4], 128, 128, 8
    $region29: #{tpu_custom_call.1} parent=1 // pred_fallthru
      _
    // Predicated region
    $region30: #{tpu_custom_call.1} parent=1 // pred_check
      _
    $region31: #{tpu_custom_call.1} parent=1 // pred_check_branch
      %189 = sbr.rel (0) target = $region33
    $region32: #{tpu_custom_call.1} parent=1 // pred_region
      %190 = dma.done [#allocation4], 384
    $region33: #{tpu_custom_call.1} parent=1 // pred_fallthru
      _
    %191 = vsyncpa [#allocation3], 1
    %192 = vsyncpa [#allocation6], 1
    %193 = vsyncpa [#allocation4], 1

</llo_original>
